<compile_context>
chip_gen: v6e
topology: v6e:2x2x1
jax: 0.10.0
libtpu: 0.0.40
codegen_flags: <defaults>
</compile_context>

<pallas_src>
import jax
import jax.numpy as jnp
from jax.experimental import pallas as pl
from jax.experimental.pallas import tpu as pltpu

_LANE = 128
_SUBLANE = 8


def _round_up(n: int, m: int) -> int:
    return ((n + m - 1) // m) * m


def _make_kernel(num_hidden_layers: int, d_pad: int, h_pad: int, compute_dtype):
    """Fused kernel. num_hidden_layers = num_layers - 1 (each followed by ReLU)."""
    cdt = compute_dtype

    def _compute(x_ref, w0_ref, b0_ref, wp_ref, wbb_ref, wbf_ref, out_ref,
                 wh_ref=None, bh_ref=None):
        # First Linear (no activation; matches the nn.Sequential structure).
        h = jnp.dot(x_ref[...].astype(cdt), w0_ref[...],
                    preferred_element_type=jnp.float32) + b0_ref[...]
        # (num_layers - 1) x [Linear + ReLU], statically unrolled.
        for l in range(num_hidden_layers):
            z = jnp.dot(h.astype(cdt), wh_ref[l],
                        preferred_element_type=jnp.float32) + bh_ref[l]
            h = jnp.maximum(z, 0.0)
        # Fused projection: wp = [wpb | wpf] -> r = [rb | rf], shape (blk, 2*Hp).
        r = jnp.dot(h.astype(cdt), wp_ref[...], preferred_element_type=jnp.float32)
        # Un-fused basis stage (slices at the 128-aligned h_pad boundary are free);
        # avoids multiplying by the zero half of a block-diagonal weight.
        rb = r[:, :h_pad].astype(cdt)
        rf = r[:, h_pad:].astype(cdt)
        yb = jnp.dot(rb, wbb_ref[...], preferred_element_type=jnp.float32)
        yf = jnp.dot(rf, wbf_ref[...], preferred_element_type=jnp.float32)
        # Lane-dense stores into one combined slab (both slices 128-aligned & wide).
        out_ref[:, :d_pad] = (yb - h).astype(out_ref.dtype)   # backcast = basis_b(..) - h
        out_ref[:, d_pad:] = yf.astype(out_ref.dtype)         # forecast

    if num_hidden_layers > 0:
        def kernel(x_ref, w0_ref, b0_ref, wh_ref, bh_ref, wp_ref, wbb_ref, wbf_ref,
                   out_ref):
            _compute(x_ref, w0_ref, b0_ref, wp_ref, wbb_ref, wbf_ref, out_ref,
                     wh_ref, bh_ref)
    else:
        def kernel(x_ref, w0_ref, b0_ref, wp_ref, wbb_ref, wbf_ref, out_ref):
            _compute(x_ref, w0_ref, b0_ref, wp_ref, wbb_ref, wbf_ref, out_ref)
    return kernel


def prepare_params(params, *, compute_dtype=jnp.float32):
    """Pad/fuse weights once, outside the kernel.

    params holds pre-transposed (in, out) weights and (1, out) biases.
    Returns a dict of lane-padded weights plus dimension metadata.
    """
    input_dim, hidden_units = params["w0"].shape
    output_dim = params["wbf"].shape[1]
    if input_dim != hidden_units:
        raise ValueError(
            "NBeatsBlock computes `basis_backward(...) - hidden`, which requires "
            "input_dim == hidden_units (same constraint as the torch module).")
    num_hidden = params["wh"].shape[0] if "wh" in params else 0

    d_pad = _round_up(input_dim, _LANE)
    h_pad = _round_up(hidden_units, _LANE)
    o_pad = _round_up(output_dim, _LANE)

    def pad2(w, rows, cols):
        return jnp.pad(w, ((0, rows - w.shape[0]), (0, cols - w.shape[1])))

    w0 = pad2(params["w0"], d_pad, h_pad).astype(compute_dtype)
    b0 = pad2(params["b0"], 1, h_pad).astype(jnp.float32)

    # Projection fusion: [wpb | wpf]  ->  (Hp, 2*Hp)
    wp = jnp.concatenate(
        [pad2(params["wpb"], h_pad, h_pad), pad2(params["wpf"], h_pad, h_pad)],
        axis=1).astype(compute_dtype)

    # Basis weights kept SEPARATE (dense) — no block-diagonal zero padding.
    wbb = pad2(params["wbb"], h_pad, d_pad).astype(compute_dtype)
    wbf = pad2(params["wbf"], h_pad, o_pad).astype(compute_dtype)

    prep = {
        "w0": w0, "b0": b0, "wp": wp, "wbb": wbb, "wbf": wbf,
        "dims": (input_dim, hidden_units, output_dim, d_pad, h_pad, o_pad, num_hidden),
    }
    if num_hidden > 0:
        prep["wh"] = jnp.pad(
            params["wh"],
            ((0, 0), (0, h_pad - hidden_units), (0, h_pad - hidden_units)),
        ).astype(compute_dtype)
        prep["bh"] = jnp.pad(
            params["bh"], ((0, 0), (0, 0), (0, h_pad - hidden_units))
        ).astype(jnp.float32)
    return prep


def nbeats_block_pallas(x, prep, *, target_blocks=4, max_block_batch=256,
                        vmem_budget_bytes=24 << 20):
    """NBeatsBlock forward with a fused Pallas kernel.

    x: (B, input_dim) float32.  prep: output of prepare_params().
    Returns (backcast, forecast) = ((B, input_dim), (B, output_dim)) in x.dtype.
    """
    B, input_dim = x.shape
    d_in, _h_units, d_out, d_pad, h_pad, o_pad, num_hidden = prep["dims"]
    assert input_dim == d_in, "x feature dim does not match prepared params"
    compute_dtype = prep["w0"].dtype

    # bf16 compute -> bf16 activation I/O (halves the per-step HBM traffic).
    io_dtype = jnp.bfloat16 if compute_dtype == jnp.bfloat16 else x.dtype
    io_size = jnp.dtype(io_dtype).itemsize
    out_width = d_pad + o_pad

    # --- VMEM budgeting (portable to v7x 64 MiB / v5e 16 MiB scoped default) ---
    weight_arrays = [prep["w0"], prep["b0"], prep["wp"], prep["wbb"], prep["wbf"]]
    if num_hidden > 0:
        weight_arrays += [prep["wh"], prep["bh"]]
    # Conservative: assume the pipeline double-buffers even the constant-index weights.
    weight_bytes = 2 * sum(int(a.size) * a.dtype.itemsize for a in weight_arrays)
    # Per-batch-row resident bytes: double-buffered in/out slabs + f32 intermediates.
    row_bytes = (2 * (d_pad + out_width) * io_size
                 + (h_pad + 2 * h_pad + d_pad + o_pad) * 4)

    # --- Batch tiling: aim for >= target_blocks grid steps (megacore + DMA overlap) ---
    block_batch = _round_up(max(pl.cdiv(B, target_blocks), _SUBLANE), _SUBLANE)
    block_batch = min(block_batch, max_block_batch)
    avail = max(vmem_budget_bytes - weight_bytes, 1 << 20)
    vmem_cap = max(_SUBLANE, (avail // max(row_bytes, 1)) // _SUBLANE * _SUBLANE)
    block_batch = max(_SUBLANE, min(block_batch, vmem_cap))

    b_pad = _round_up(B, block_batch)
    grid = (b_pad // block_batch,)

    # Zero-pad x to (b_pad, d_pad) once in HBM; padded rows/lanes stay exact zeros.
    x_pad = jnp.pad(x, ((0, b_pad - B), (0, d_pad - input_dim))).astype(io_dtype)

    def full(shape):
        n = len(shape)
        return pl.BlockSpec(shape, lambda i, _n=n: (0,) * _n)

    in_specs = [
        pl.BlockSpec((block_batch, d_pad), lambda i: (i, 0)),
        full(prep["w0"].shape),
        full(prep["b0"].shape),
    ]
    args = [x_pad, prep["w0"], prep["b0"]]
    if num_hidden > 0:
        in_specs += [full(prep["wh"].shape), full(prep["bh"].shape)]
        args += [prep["wh"], prep["bh"]]
    in_specs += [full(prep["wp"].shape), full(prep["wbb"].shape), full(prep["wbf"].shape)]
    args += [prep["wp"], prep["wbb"], prep["wbf"]]

    out_specs = pl.BlockSpec((block_batch, out_width), lambda i: (i, 0))
    out_shape = jax.ShapeDtypeStruct((b_pad, out_width), io_dtype)

    flops = 2 * b_pad * (d_pad * h_pad
                         + num_hidden * h_pad * h_pad
                         + h_pad * (2 * h_pad)
                         + h_pad * d_pad
                         + h_pad * o_pad)
    bytes_accessed = (x_pad.size * x_pad.dtype.itemsize
                      + b_pad * out_width * io_size
                      + sum(int(a.size) * a.dtype.itemsize for a in args[1:]))

    est_vmem = weight_bytes + block_batch * row_bytes + (2 << 20)
    vmem_limit = int(min(max(2 * est_vmem, 32 << 20), 48 << 20))

    out = pl.pallas_call(
        _make_kernel(num_hidden, d_pad, h_pad, compute_dtype),
        out_shape=out_shape,
        grid_spec=pltpu.PrefetchScalarGridSpec(
            num_scalar_prefetch=0,
            grid=grid,
            in_specs=in_specs,
            out_specs=out_specs,
        ),
        compiler_params=pltpu.CompilerParams(
            dimension_semantics=("parallel",),
            vmem_limit_bytes=vmem_limit),
        cost_estimate=pl.CostEstimate(
            flops=flops, transcendentals=0, bytes_accessed=bytes_accessed),
    )(*args)

    backcast = out[:B, :input_dim].astype(x.dtype)
    forecast = out[:B, d_pad:d_pad + d_out].astype(x.dtype)
    return backcast, forecast


def init_params(key, input_dim, output_dim, hidden_units, num_layers):
    """Deterministic init; shapes follow the PyTorch module, weights stored (in, out)."""
    assert num_layers >= 1 and hidden_units >= 1

    def uniform(key, shape, fan_in):
        bound = 1.0 / jnp.sqrt(jnp.float32(fan_in))
        return jax.random.uniform(key, shape, jnp.float32, -bound, bound)

    keys = jax.random.split(key, 8)
    params = {
        "w0": uniform(keys[0], (input_dim, hidden_units), input_dim),
        "b0": uniform(keys[1], (1, hidden_units), input_dim),
        "wpb": uniform(keys[2], (hidden_units, hidden_units), hidden_units),
        "wpf": uniform(keys[3], (hidden_units, hidden_units), hidden_units),
        "wbb": uniform(keys[4], (hidden_units, input_dim), hidden_units),
        "wbf": uniform(keys[5], (hidden_units, output_dim), hidden_units),
    }
    if num_layers > 1:
        # torch's `[Linear, ReLU] * (num_layers-1)` shares ONE Linear instance, so
        # replicate the same hidden weight/bias for every repetition.
        wh1 = uniform(keys[6], (hidden_units, hidden_units), hidden_units)
        bh1 = uniform(keys[7], (1, hidden_units), hidden_units)
        params["wh"] = jnp.tile(wh1[None], (num_layers - 1, 1, 1))
        params["bh"] = jnp.tile(bh1[None], (num_layers - 1, 1, 1))
    return params


def nbeats_block_ref(x, params):
    """Pure-JAX reference for correctness checking."""
    h = x @ params["w0"] + params["b0"]
    if "wh" in params:
        for l in range(params["wh"].shape[0]):
            h = jnp.maximum(h @ params["wh"][l] + params["bh"][l], 0.0)
    back = (h @ params["wpb"]) @ params["wbb"] - h
    fwd = (h @ params["wpf"]) @ params["wbf"]
    return back, fwd


if __name__ == "__main__":
    # NOTE: the torch module's `residual - x` (with x reassigned to layers(x)) only
    # broadcasts cleanly when input_dim == hidden_units — same constraint here.
    batch = 16
    input_dim = 32
    hidden_units = 32
    output_dim = 24
    num_layers = 3

    key = jax.random.PRNGKey(0)
    kx, kp = jax.random.split(key)
    x = jax.random.normal(kx, (batch, input_dim), jnp.float32)
    params = init_params(kp, input_dim, output_dim, hidden_units, num_layers)

    back_ref, fwd_ref = nbeats_block_ref(x, params)

    # f32 compute path (tight check) — grid is (2,), exercising multi-block pipelining.
    prep_f32 = prepare_params(params, compute_dtype=jnp.float32)
    back, fwd = nbeats_block_pallas(x, prep_f32)
    jax.block_until_ready((back, fwd))
    assert back.shape == (batch, input_dim) and fwd.shape == (batch, output_dim)
    assert jnp.allclose(back, back_ref, atol=1e-5, rtol=1e-5)
    assert jnp.allclose(fwd, fwd_ref, atol=1e-5, rtol=1e-5)

    # Ragged batch (not a multiple of the block) exercises the zero-padded rows.
    x_odd = jax.random.normal(kx, (13, input_dim), jnp.float32)
    back_odd_ref, fwd_odd_ref = nbeats_block_ref(x_odd, params)
    back_odd, fwd_odd = nbeats_block_pallas(x_odd, prep_f32)
    jax.block_until_ready((back_odd, fwd_odd))
    assert back_odd.shape == (13, input_dim) and fwd_odd.shape == (13, output_dim)
    assert jnp.allclose(back_odd, back_odd_ref, atol=1e-5, rtol=1e-5)
    assert jnp.allclose(fwd_odd, fwd_odd_ref, atol=1e-5, rtol=1e-5)

    # bf16 MXU inputs + bf16 activation I/O (f32 accumulation) — loose check.
    prep_bf16 = prepare_params(params, compute_dtype=jnp.bfloat16)
    back16, fwd16 = nbeats_block_pallas(x, prep_bf16)
    jax.block_until_ready((back16, fwd16))
    assert jnp.allclose(back16, back_ref, atol=2e-1, rtol=2e-1)
    assert jnp.allclose(fwd16, fwd_ref, atol=2e-1, rtol=2e-1)

    # TODO(synk): fuse a full N-BEATS stack (multiple blocks) into one pallas_call,
    # carrying the residual in VMEM scratch across an "arbitrary" block axis.

    print("KERNEL_OK")
</pallas_src>

<mosaic_0001>
module attributes {stable_mosaic.version = 11 : i64} {
  func.func @kernel(%arg0: i32, %arg1: memref<8x128xf32, #tpu.memory_space<vmem>>, %arg2: memref<128x128xf32, #tpu.memory_space<vmem>>, %arg3: memref<1x128xf32, #tpu.memory_space<vmem>>, %arg4: memref<2x128x128xf32, #tpu.memory_space<vmem>>, %arg5: memref<2x1x128xf32, #tpu.memory_space<vmem>>, %arg6: memref<128x256xf32, #tpu.memory_space<vmem>>, %arg7: memref<128x128xf32, #tpu.memory_space<vmem>>, %arg8: memref<128x128xf32, #tpu.memory_space<vmem>>, %arg9: memref<8x256xf32, #tpu.memory_space<vmem>>) attributes {dimension_semantics = [#tpu.dimension_semantics<parallel>], iteration_bounds = array<i64: 2>, scalar_prefetch = 0 : i64, scratch_operands = 0 : i64, tpu.core_type = #tpu.core_type<tc>, window_params = [{transform_indices = @transform_0, window_bounds = array<i64: 8, 128>}, {pipeline_mode = #tpu.pipeline_mode<synchronous>, transform_indices = @transform_1, window_bounds = array<i64: 128, 128>}, {pipeline_mode = #tpu.pipeline_mode<synchronous>, transform_indices = @transform_2, window_bounds = array<i64: 1, 128>}, {pipeline_mode = #tpu.pipeline_mode<synchronous>, transform_indices = @transform_3, window_bounds = array<i64: 2, 128, 128>}, {pipeline_mode = #tpu.pipeline_mode<synchronous>, transform_indices = @transform_4, window_bounds = array<i64: 2, 1, 128>}, {pipeline_mode = #tpu.pipeline_mode<synchronous>, transform_indices = @transform_5, window_bounds = array<i64: 128, 256>}, {pipeline_mode = #tpu.pipeline_mode<synchronous>, transform_indices = @transform_6, window_bounds = array<i64: 128, 128>}, {pipeline_mode = #tpu.pipeline_mode<synchronous>, transform_indices = @transform_7, window_bounds = array<i64: 128, 128>}, {transform_indices = @transform_8, window_bounds = array<i64: 8, 256>}]} {
    %c0 = arith.constant 0 : index
    %c0_0 = arith.constant 0 : index
    %0 = vector.load %arg1[%c0, %c0_0] : memref<8x128xf32, #tpu.memory_space<vmem>>, vector<8x128xf32>
    %c0_1 = arith.constant 0 : index
    %c0_2 = arith.constant 0 : index
    %1 = vector.load %arg2[%c0_1, %c0_2] : memref<128x128xf32, #tpu.memory_space<vmem>>, vector<128x128xf32>
    %cst = arith.constant dense<0.000000e+00> : vector<8x128xf32>
    %2 = tpu.matmul %0, %1, %cst {dimension_numbers = #tpu.dot_dimension_numbers<[1], [0], [0], [1], [0, 0, 1, 1], [], []>} : vector<8x128xf32>, vector<128x128xf32>, vector<8x128xf32> -> vector<8x128xf32>
    %c0_3 = arith.constant 0 : index
    %c0_4 = arith.constant 0 : index
    %3 = vector.load %arg3[%c0_3, %c0_4] : memref<1x128xf32, #tpu.memory_space<vmem>>, vector<1x128xf32>
    %4 = vector.broadcast %3 : vector<1x128xf32> to vector<8x128xf32>
    %5 = arith.addf %2, %4 : vector<8x128xf32>
    %c0_5 = arith.constant 0 : index
    %c0_6 = arith.constant 0 : index
    %c0_7 = arith.constant 0 : index
    %6 = vector.load %arg4[%c0_5, %c0_6, %c0_7] : memref<2x128x128xf32, #tpu.memory_space<vmem>>, vector<1x128x128xf32>
    %7 = vector.shape_cast %6 : vector<1x128x128xf32> to vector<128x128xf32>
    %cst_8 = arith.constant dense<0.000000e+00> : vector<8x128xf32>
    %8 = tpu.matmul %5, %7, %cst_8 {dimension_numbers = #tpu.dot_dimension_numbers<[1], [0], [0], [1], [0, 0, 1, 1], [], []>} : vector<8x128xf32>, vector<128x128xf32>, vector<8x128xf32> -> vector<8x128xf32>
    %c0_9 = arith.constant 0 : index
    %c0_10 = arith.constant 0 : index
    %c0_11 = arith.constant 0 : index
    %9 = vector.load %arg5[%c0_9, %c0_10, %c0_11] : memref<2x1x128xf32, #tpu.memory_space<vmem>>, vector<1x1x128xf32>
    %10 = vector.shape_cast %9 : vector<1x1x128xf32> to vector<1x128xf32>
    %11 = vector.broadcast %10 : vector<1x128xf32> to vector<8x128xf32>
    %12 = arith.addf %8, %11 : vector<8x128xf32>
    %cst_12 = arith.constant 0.000000e+00 : f32
    %13 = vector.broadcast %cst_12 : f32 to vector<8x128xf32>
    %14 = arith.maximumf %12, %13 : vector<8x128xf32>
    %c1 = arith.constant 1 : index
    %c0_13 = arith.constant 0 : index
    %c0_14 = arith.constant 0 : index
    %15 = vector.load %arg4[%c1, %c0_13, %c0_14] : memref<2x128x128xf32, #tpu.memory_space<vmem>>, vector<1x128x128xf32>
    %16 = vector.shape_cast %15 : vector<1x128x128xf32> to vector<128x128xf32>
    %cst_15 = arith.constant dense<0.000000e+00> : vector<8x128xf32>
    %17 = tpu.matmul %14, %16, %cst_15 {dimension_numbers = #tpu.dot_dimension_numbers<[1], [0], [0], [1], [0, 0, 1, 1], [], []>} : vector<8x128xf32>, vector<128x128xf32>, vector<8x128xf32> -> vector<8x128xf32>
    %c1_16 = arith.constant 1 : index
    %c0_17 = arith.constant 0 : index
    %c0_18 = arith.constant 0 : index
    %18 = vector.load %arg5[%c1_16, %c0_17, %c0_18] : memref<2x1x128xf32, #tpu.memory_space<vmem>>, vector<1x1x128xf32>
    %19 = vector.shape_cast %18 : vector<1x1x128xf32> to vector<1x128xf32>
    %20 = vector.broadcast %19 : vector<1x128xf32> to vector<8x128xf32>
    %21 = arith.addf %17, %20 : vector<8x128xf32>
    %cst_19 = arith.constant 0.000000e+00 : f32
    %22 = vector.broadcast %cst_19 : f32 to vector<8x128xf32>
    %23 = arith.maximumf %21, %22 : vector<8x128xf32>
    %c0_20 = arith.constant 0 : index
    %c0_21 = arith.constant 0 : index
    %24 = vector.load %arg6[%c0_20, %c0_21] : memref<128x256xf32, #tpu.memory_space<vmem>>, vector<128x256xf32>
    %cst_22 = arith.constant dense<0.000000e+00> : vector<8x256xf32>
    %25 = tpu.matmul %23, %24, %cst_22 {dimension_numbers = #tpu.dot_dimension_numbers<[1], [0], [0], [1], [0, 0, 1, 1], [], []>} : vector<8x128xf32>, vector<128x256xf32>, vector<8x256xf32> -> vector<8x256xf32>
    %26 = vector.extract_strided_slice %25 {offsets = [0, 0], sizes = [8, 128], strides = [1, 1]} : vector<8x256xf32> to vector<8x128xf32>
    %27 = vector.extract_strided_slice %25 {offsets = [0, 128], sizes = [8, 128], strides = [1, 1]} : vector<8x256xf32> to vector<8x128xf32>
    %c0_23 = arith.constant 0 : index
    %c0_24 = arith.constant 0 : index
    %28 = vector.load %arg7[%c0_23, %c0_24] : memref<128x128xf32, #tpu.memory_space<vmem>>, vector<128x128xf32>
    %cst_25 = arith.constant dense<0.000000e+00> : vector<8x128xf32>
    %29 = tpu.matmul %26, %28, %cst_25 {dimension_numbers = #tpu.dot_dimension_numbers<[1], [0], [0], [1], [0, 0, 1, 1], [], []>} : vector<8x128xf32>, vector<128x128xf32>, vector<8x128xf32> -> vector<8x128xf32>
    %c0_26 = arith.constant 0 : index
    %c0_27 = arith.constant 0 : index
    %30 = vector.load %arg8[%c0_26, %c0_27] : memref<128x128xf32, #tpu.memory_space<vmem>>, vector<128x128xf32>
    %cst_28 = arith.constant dense<0.000000e+00> : vector<8x128xf32>
    %31 = tpu.matmul %27, %30, %cst_28 {dimension_numbers = #tpu.dot_dimension_numbers<[1], [0], [0], [1], [0, 0, 1, 1], [], []>} : vector<8x128xf32>, vector<128x128xf32>, vector<8x128xf32> -> vector<8x128xf32>
    %32 = arith.subf %29, %23 : vector<8x128xf32>
    %c0_29 = arith.constant 0 : index
    %c0_30 = arith.constant 0 : index
    %33 = vector.load %arg9[%c0_29, %c0_30] : memref<8x256xf32, #tpu.memory_space<vmem>>, vector<8x128xf32>
    tpu.vector_store %arg9[%c0_29, %c0_30], %32 {strides = array<i32>} : memref<8x256xf32, #tpu.memory_space<vmem>>, vector<8x128xf32>,
    %c0_31 = arith.constant 0 : index
    %c128 = arith.constant 128 : index
    %34 = vector.load %arg9[%c0_31, %c128] : memref<8x256xf32, #tpu.memory_space<vmem>>, vector<8x128xf32>
    tpu.vector_store %arg9[%c0_31, %c128], %31 {strides = array<i32>} : memref<8x256xf32, #tpu.memory_space<vmem>>, vector<8x128xf32>,
    return
  }
  func.func @transform_0(%arg0: i32) -> (i32, i32) {
    %c0_i32 = arith.constant 0 : i32
    %c0_i32_0 = arith.constant 0 : i32
    return %arg0, %c0_i32 : i32, i32
  }
  func.func @transform_1(%arg0: i32) -> (i32, i32) {
    %c0_i32 = arith.constant 0 : i32
    %c0_i32_0 = arith.constant 0 : i32
    %c0_i32_1 = arith.constant 0 : i32
    return %c0_i32, %c0_i32_0 : i32, i32
  }
  func.func @transform_2(%arg0: i32) -> (i32, i32) {
    %c0_i32 = arith.constant 0 : i32
    %c0_i32_0 = arith.constant 0 : i32
    %c0_i32_1 = arith.constant 0 : i32
    return %c0_i32, %c0_i32_0 : i32, i32
  }
  func.func @transform_3(%arg0: i32) -> (i32, i32, i32) {
    %c0_i32 = arith.constant 0 : i32
    %c0_i32_0 = arith.constant 0 : i32
    %c0_i32_1 = arith.constant 0 : i32
    %c0_i32_2 = arith.constant 0 : i32
    return %c0_i32, %c0_i32_0, %c0_i32_1 : i32, i32, i32
  }
  func.func @transform_4(%arg0: i32) -> (i32, i32, i32) {
    %c0_i32 = arith.constant 0 : i32
    %c0_i32_0 = arith.constant 0 : i32
    %c0_i32_1 = arith.constant 0 : i32
    %c0_i32_2 = arith.constant 0 : i32
    return %c0_i32, %c0_i32_0, %c0_i32_1 : i32, i32, i32
  }
  func.func @transform_5(%arg0: i32) -> (i32, i32) {
    %c0_i32 = arith.constant 0 : i32
    %c0_i32_0 = arith.constant 0 : i32
    %c0_i32_1 = arith.constant 0 : i32
    return %c0_i32, %c0_i32_0 : i32, i32
  }
  func.func @transform_6(%arg0: i32) -> (i32, i32) {
    %c0_i32 = arith.constant 0 : i32
    %c0_i32_0 = arith.constant 0 : i32
    %c0_i32_1 = arith.constant 0 : i32
    return %c0_i32, %c0_i32_0 : i32, i32
  }
  func.func @transform_7(%arg0: i32) -> (i32, i32) {
    %c0_i32 = arith.constant 0 : i32
    %c0_i32_0 = arith.constant 0 : i32
    %c0_i32_1 = arith.constant 0 : i32
    return %c0_i32, %c0_i32_0 : i32, i32
  }
  func.func @transform_8(%arg0: i32) -> (i32, i32) {
    %c0_i32 = arith.constant 0 : i32
    %c0_i32_0 = arith.constant 0 : i32
    return %arg0, %c0_i32 : i32, i32
  }
}

</mosaic_0001>

<llo_original>
// kernel: tpu_custom_call.1
$region0: #{tpu_custom_call.1}
  #allocation0 [shape = 'u32[]', space=smem, size = 0x4, offset = 0x4, fixed_abs, tag = 'smem constant byte address 0x4 - core index']
  #allocation1 [shape = 'u32[144,128]{1,0:T(1,128)}', space=vmem, size = 0x12000, scoped, tag = 'internal scratch']
  %s0 = inlined_call_operand.hbm [shape: f32[16,128], index: 0, kind: input, shape index: {}]
  %s1 = inlined_call_operand.hbm [shape: f32[128,128], index: 1, kind: input, shape index: {}]
  %s2 = inlined_call_operand.vmem [shape: f32[1,128], index: 2, kind: input, shape index: {}]
  %s3 = inlined_call_operand.hbm [shape: f32[2,128,128], index: 3, kind: input, shape index: {}]
  %s4 = inlined_call_operand.vmem [shape: f32[2,1,128], index: 4, kind: input, shape index: {}]
  %s5 = inlined_call_operand.hbm [shape: f32[128,256], index: 5, kind: input, shape index: {}]
  %s6 = inlined_call_operand.hbm [shape: f32[128,128], index: 6, kind: input, shape index: {}]
  %s7 = inlined_call_operand.hbm [shape: f32[128,128], index: 7, kind: input, shape index: {}]
  %s8 = inlined_call_operand.hbm [shape: f32[16,256], index: 8, kind: output, shape index: {}]
  %s9 = sld [smem:[#allocation0]]
  $region89: #{tpu_custom_call.1} parent=0
    _
  %s11 = ssub.s32 1, %s9
  %s12 = scalar_select 0, %s11, %s9
  $region1: #{tpu_custom_call.1} parent=0
    #allocation2 [shape = 'u8[8192]{0}', space=vmem, size = 0x2000, scoped, tag = 'input window, operand 0']
    #allocation3 [shape = 's32[2]{0}', space=sflag, size = 0x8, scoped, tag = 'scoped memory for tpu_custom_call.1']
    #allocation4 [shape = 's32[2]{0}', space=sflag, size = 0x8, scoped, tag = 'scoped memory for tpu_custom_call.1']
    #allocation5 [shape = 'u8[65536]{0}', space=vmem, size = 0x10000, scoped, tag = 'input window, operand 1, single buffered']
    #allocation6 [shape = 's32[1]{0}', space=sflag, size = 0x4, scoped, tag = 'scoped memory for tpu_custom_call.1']
    #allocation7 [shape = 'u8[131072]{0}', space=vmem, size = 0x20000, scoped, tag = 'input window, operand 3, single buffered']
    #allocation8 [shape = 'u8[131072]{0}', space=vmem, size = 0x20000, scoped, tag = 'input window, operand 5, single buffered']
    #allocation9 [shape = 's32[1]{0}', space=sflag, size = 0x4, scoped, tag = 'scoped memory for tpu_custom_call.1']
    #allocation10 [shape = 'u8[65536]{0}', space=vmem, size = 0x10000, scoped, tag = 'input window, operand 6, single buffered']
    #allocation11 [shape = 'u8[65536]{0}', space=vmem, size = 0x10000, scoped, tag = 'input window, operand 7, single buffered']
    #allocation12 [shape = 's32[1]{0}', space=sflag, size = 0x4, scoped, tag = 'scoped memory for tpu_custom_call.1']
    #allocation13 [shape = 'u8[16384]{0}', space=vmem, size = 0x4000, scoped, tag = 'output window, operand 0']
    %13 = vsyncpa [#allocation3], 0
    %s14 = scalar_lea.sflag [#allocation3], 1
    %15 = vsyncpa %s14, 0
    %16 = vsyncpa [#allocation6], 0
    %17 = vsyncpa [#allocation9], 0
    %18 = vsyncpa [#allocation12], 0
    %19 = vsyncpa [#allocation4], 0
    %s20 = scalar_lea.sflag [#allocation4], 1
    %21 = vsyncpa %s20, 0
    loop: start=0, step=1, limit=4
    $region2: #{tpu_custom_call.1} parent=1 // loop_pre_header
      _
    $region3: #{tpu_custom_call.1} parent=1 // loop_header
      %s23 = sphi 0, %s27
      %p24 = scmp.ge.s32.totalorder %s23, 4
      %s33 = sphi 0, %s35
      %s36 = sphi 0, %s33
      %s37 = sphi 0, %s36
      %s53 = sphi 0, %s37
      %s57 = sphi 0, %s57
      %s59 = sphi 0, %s57
      %s60 = sphi 0, %s59
      %s74 = sphi 0, %s60
      %s78 = sphi 0, %s78
      %s80 = sphi 0, %s78
      %s81 = sphi 0, %s80
      %s95 = sphi 0, %s81
      %s99 = sphi 0, %s99
      %s101 = sphi 0, %s99
      %s102 = sphi 0, %s101
      %s116 = sphi 0, %s102
      %s120 = sphi 0, %s120
      %s122 = sphi 0, %s120
      %s123 = sphi 0, %s122
      %s137 = sphi 0, %s123
      %s141 = sphi 0, %s141
      %s143 = sphi 0, %s141
      %s144 = sphi 0, %s143
      %s158 = sphi 0, %s144
      %s162 = sphi 0, %s162
      %s164 = sphi 0, %s162
      %s165 = sphi 0, %s164
      %s179 = sphi 0, %s165
      %s183 = sphi 0, %s183
      %s185 = sphi 0, %s183
      %s186 = sphi 0, %s185
      %s200 = sphi 0, %s186
      %s206 = sphi 0, %s208
      %s209 = sphi 0, %s206
      %s210 = sphi 0, %s209
      %s226 = sphi 0, %s210
    $region4: #{tpu_custom_call.1} parent=1 // loop_header_branch
      %26 = sbr.rel (%p24) target = $region8
    $region5: #{tpu_custom_call.1} parent=1 // loop_body
      %s28 = ssub.s32 %s23, 1
      %s29 = ssub.s32 %s23, 2
      %s30 = sadd.s32 %s23, 1
      %s31 = ssub.s32 %s23, %s30
      %p32 = scmp.eq.s32.totalorder %s31, 0
      %s34 = sadd.s32 %s33, 1
      %s35 = scalar_select %p32, %s33, %s34
      %p38 = pneg %p32
      %p39 = scmp.eq.s32.totalorder %s23, 1
      %p40 = por %p38, %p39
      %p41 = scmp.ne.s32.totalorder %s33, %s36
      %p42 = scmp.eq.s32.totalorder %s23, 0
      %p43 = por %p41, %p42
      %p44 = scmp.ne.s32.totalorder %s33, %s36
      %p45 = scmp.eq.s32.totalorder %s28, 1
      %p46 = por %p44, %p45
      %p47 = scmp.ne.s32.totalorder %s36, %s37
      %p48 = scmp.eq.s32.totalorder %s28, 0
      %p49 = por %p47, %p48
      %p50 = scmp.ne.s32.totalorder %s36, %s37
      %p51 = scmp.eq.s32.totalorder %s29, 1
      %p52 = por %p50, %p51
      %p54 = scmp.ne.s32.totalorder %s37, %s53
      %p55 = scmp.eq.s32.totalorder %s29, 0
      %p56 = por %p54, %p55
      %s58 = sadd.s32 %s57, 1
      %p61 = scmp.eq.s32.totalorder %s23, 1
      %p62 = scmp.ne.s32.totalorder %s57, %s59
      %p63 = scmp.eq.s32.totalorder %s23, 0
      %p64 = por %p62, %p63
      %p65 = scmp.ne.s32.totalorder %s57, %s59
      %p66 = scmp.eq.s32.totalorder %s28, 1
      %p67 = por %p65, %p66
      %p68 = scmp.ne.s32.totalorder %s59, %s60
      %p69 = scmp.eq.s32.totalorder %s28, 0
      %p70 = por %p68, %p69
      %p71 = scmp.ne.s32.totalorder %s59, %s60
      %p72 = scmp.eq.s32.totalorder %s29, 1
      %p73 = por %p71, %p72
      %p75 = scmp.ne.s32.totalorder %s60, %s74
      %p76 = scmp.eq.s32.totalorder %s29, 0
      %p77 = por %p75, %p76
      %s79 = sadd.s32 %s78, 1
      %p82 = scmp.eq.s32.totalorder %s23, 1
      %p83 = scmp.ne.s32.totalorder %s78, %s80
      %p84 = scmp.eq.s32.totalorder %s23, 0
      %p85 = por %p83, %p84
      %p86 = scmp.ne.s32.totalorder %s78, %s80
      %p87 = scmp.eq.s32.totalorder %s28, 1
      %p88 = por %p86, %p87
      %p89 = scmp.ne.s32.totalorder %s80, %s81
      %p90 = scmp.eq.s32.totalorder %s28, 0
      %p91 = por %p89, %p90
      %p92 = scmp.ne.s32.totalorder %s80, %s81
      %p93 = scmp.eq.s32.totalorder %s29, 1
      %p94 = por %p92, %p93
      %p96 = scmp.ne.s32.totalorder %s81, %s95
      %p97 = scmp.eq.s32.totalorder %s29, 0
      %p98 = por %p96, %p97
      %s100 = sadd.s32 %s99, 1
      %p103 = scmp.eq.s32.totalorder %s23, 1
      %p104 = scmp.ne.s32.totalorder %s99, %s101
      %p105 = scmp.eq.s32.totalorder %s23, 0
      %p106 = por %p104, %p105
      %p107 = scmp.ne.s32.totalorder %s99, %s101
      %p108 = scmp.eq.s32.totalorder %s28, 1
      %p109 = por %p107, %p108
      %p110 = scmp.ne.s32.totalorder %s101, %s102
      %p111 = scmp.eq.s32.totalorder %s28, 0
      %p112 = por %p110, %p111
      %p113 = scmp.ne.s32.totalorder %s101, %s102
      %p114 = scmp.eq.s32.totalorder %s29, 1
      %p115 = por %p113, %p114
      %p117 = scmp.ne.s32.totalorder %s102, %s116
      %p118 = scmp.eq.s32.totalorder %s29, 0
      %p119 = por %p117, %p118
      %s121 = sadd.s32 %s120, 1
      %p124 = scmp.eq.s32.totalorder %s23, 1
      %p125 = scmp.ne.s32.totalorder %s120, %s122
      %p126 = scmp.eq.s32.totalorder %s23, 0
      %p127 = por %p125, %p126
      %p128 = scmp.ne.s32.totalorder %s120, %s122
      %p129 = scmp.eq.s32.totalorder %s28, 1
      %p130 = por %p128, %p129
      %p131 = scmp.ne.s32.totalorder %s122, %s123
      %p132 = scmp.eq.s32.totalorder %s28, 0
      %p133 = por %p131, %p132
      %p134 = scmp.ne.s32.totalorder %s122, %s123
      %p135 = scmp.eq.s32.totalorder %s29, 1
      %p136 = por %p134, %p135
      %p138 = scmp.ne.s32.totalorder %s123, %s137
      %p139 = scmp.eq.s32.totalorder %s29, 0
      %p140 = por %p138, %p139
      %s142 = sadd.s32 %s141, 1
      %p145 = scmp.eq.s32.totalorder %s23, 1
      %p146 = scmp.ne.s32.totalorder %s141, %s143
      %p147 = scmp.eq.s32.totalorder %s23, 0
      %p148 = por %p146, %p147
      %p149 = scmp.ne.s32.totalorder %s141, %s143
      %p150 = scmp.eq.s32.totalorder %s28, 1
      %p151 = por %p149, %p150
      %p152 = scmp.ne.s32.totalorder %s143, %s144
      %p153 = scmp.eq.s32.totalorder %s28, 0
      %p154 = por %p152, %p153
      %p155 = scmp.ne.s32.totalorder %s143, %s144
      %p156 = scmp.eq.s32.totalorder %s29, 1
      %p157 = por %p155, %p156
      %p159 = scmp.ne.s32.totalorder %s144, %s158
      %p160 = scmp.eq.s32.totalorder %s29, 0
      %p161 = por %p159, %p160
      %s163 = sadd.s32 %s162, 1
      %p166 = scmp.eq.s32.totalorder %s23, 1
      %p167 = scmp.ne.s32.totalorder %s162, %s164
      %p168 = scmp.eq.s32.totalorder %s23, 0
      %p169 = por %p167, %p168
      %p170 = scmp.ne.s32.totalorder %s162, %s164
      %p171 = scmp.eq.s32.totalorder %s28, 1
      %p172 = por %p170, %p171
      %p173 = scmp.ne.s32.totalorder %s164, %s165
      %p174 = scmp.eq.s32.totalorder %s28, 0
      %p175 = por %p173, %p174
      %p176 = scmp.ne.s32.totalorder %s164, %s165
      %p177 = scmp.eq.s32.totalorder %s29, 1
      %p178 = por %p176, %p177
      %p180 = scmp.ne.s32.totalorder %s165, %s179
      %p181 = scmp.eq.s32.totalorder %s29, 0
      %p182 = por %p180, %p181
      %s184 = sadd.s32 %s183, 1
      %p187 = scmp.eq.s32.totalorder %s23, 1
      %p188 = scmp.ne.s32.totalorder %s183, %s185
      %p189 = scmp.eq.s32.totalorder %s23, 0
      %p190 = por %p188, %p189
      %p191 = scmp.ne.s32.totalorder %s183, %s185
      %p192 = scmp.eq.s32.totalorder %s28, 1
      %p193 = por %p191, %p192
      %p194 = scmp.ne.s32.totalorder %s185, %s186
      %p195 = scmp.eq.s32.totalorder %s28, 0
      %p196 = por %p194, %p195
      %p197 = scmp.ne.s32.totalorder %s185, %s186
      %p198 = scmp.eq.s32.totalorder %s29, 1
      %p199 = por %p197, %p198
      %p201 = scmp.ne.s32.totalorder %s186, %s200
      %p202 = scmp.eq.s32.totalorder %s29, 0
      %p203 = por %p201, %p202
      %s204 = ssub.s32 %s23, %s30
      %p205 = scmp.eq.s32.totalorder %s204, 0
      %s207 = sadd.s32 %s206, 1
      %s208 = scalar_select %p205, %s206, %s207
      %p211 = pneg %p205
      %p212 = scmp.eq.s32.totalorder %s23, 1
      %p213 = por %p211, %p212
      %p214 = scmp.ne.s32.totalorder %s206, %s209
      %p215 = scmp.eq.s32.totalorder %s23, 0
      %p216 = por %p214, %p215
      %p217 = scmp.ne.s32.totalorder %s206, %s209
      %p218 = scmp.eq.s32.totalorder %s28, 1
      %p219 = por %p217, %p218
      %p220 = scmp.ne.s32.totalorder %s209, %s210
      %p221 = scmp.eq.s32.totalorder %s28, 0
      %p222 = por %p220, %p221
      %p223 = scmp.ne.s32.totalorder %s209, %s210
      %p224 = scmp.eq.s32.totalorder %s29, 1
      %p225 = por %p223, %p224
      %p227 = scmp.ne.s32.totalorder %s210, %s226
      %p228 = scmp.eq.s32.totalorder %s29, 0
      %p229 = por %p227, %p228
      %p230 = scmp.le.s32.totalorder 1, %s23
      %p231 = scmp.lt.s32.totalorder %s23, 3
      %p232 = pnand %p230, %p231
      %p233 = pneg %p232
      // Predicated region
      $region9: #{tpu_custom_call.1} parent=5 // pred_check
        _
      $region10: #{tpu_custom_call.1} parent=5 // pred_check_branch
        %235 = sbr.rel (%p232) target = $region12
      $region11: #{tpu_custom_call.1} parent=5 // pred_region
        %s236 = ssub.s32 %s23, 1
        // Predicated region
        $region13: #{tpu_custom_call.1} parent=11 // pred_check
          %p237 = pneg %p70
        $region14: #{tpu_custom_call.1} parent=11 // pred_check_branch
          %239 = sbr.rel (%p237) target = $region16
        $region15: #{tpu_custom_call.1} parent=11 // pred_region
          %s241 = ssub.s32 2048, 2048
          %242 = vsyncadd [#allocation6], %s241
          %s243 = sshll.u32 [#allocation5], 4
          %s244 = int_to_ptr.vmem [resolvable:$true] %s243
          %249 = dma.hbm_to_vmem [thread:$0]  %s1, 2048, %s244, [#allocation6], 128, 128, 8
        $region16: #{tpu_custom_call.1} parent=11 // pred_fallthru
          _
        // Predicated region
        $region17: #{tpu_custom_call.1} parent=11 // pred_check
          %p250 = pneg %p91
        $region18: #{tpu_custom_call.1} parent=11 // pred_check_branch
          %252 = sbr.rel (%p250) target = $region20
        $region19: #{tpu_custom_call.1} parent=11 // pred_region
          _
        $region20: #{tpu_custom_call.1} parent=11 // pred_fallthru
          _
        // Predicated region
        $region21: #{tpu_custom_call.1} parent=11 // pred_check
          %p253 = pneg %p112
        $region22: #{tpu_custom_call.1} parent=11 // pred_check_branch
          %255 = sbr.rel (%p253) target = $region24
        $region23: #{tpu_custom_call.1} parent=11 // pred_region
          %s257 = ssub.s32 4096, 4096
          %258 = vsyncadd [#allocation6], %s257
          %s259 = sshll.u32 [#allocation7], 4
          %s260 = int_to_ptr.vmem [resolvable:$true] %s259
          %265 = dma.hbm_to_vmem [thread:$0]  %s3, 4096, %s260, [#allocation6], 128, 128, 8
        $region24: #{tpu_custom_call.1} parent=11 // pred_fallthru
          _
        // Predicated region
        $region25: #{tpu_custom_call.1} parent=11 // pred_check
          %p266 = pneg %p133
        $region26: #{tpu_custom_call.1} parent=11 // pred_check_branch
          %268 = sbr.rel (%p266) target = $region28
        $region27: #{tpu_custom_call.1} parent=11 // pred_region
          _
        $region28: #{tpu_custom_call.1} parent=11 // pred_fallthru
          _
        // Predicated region
        $region29: #{tpu_custom_call.1} parent=11 // pred_check
          %p269 = pneg %p154
        $region30: #{tpu_custom_call.1} parent=11 // pred_check_branch
          %271 = sbr.rel (%p269) target = $region32
        $region31: #{tpu_custom_call.1} parent=11 // pred_region
          %s273 = ssub.s32 4096, 4096
          %274 = vsyncadd [#allocation9], %s273
          %s275 = sshll.u32 [#allocation8], 4
          %s276 = int_to_ptr.vmem [resolvable:$true] %s275
          %281 = dma.hbm_to_vmem [thread:$0]  %s5, 4096, %s276, [#allocation9], 256, 256, 16
        $region32: #{tpu_custom_call.1} parent=11 // pred_fallthru
          _
        // Predicated region
        $region33: #{tpu_custom_call.1} parent=11 // pred_check
          %p282 = pneg %p175
        $region34: #{tpu_custom_call.1} parent=11 // pred_check_branch
          %284 = sbr.rel (%p282) target = $region36
        $region35: #{tpu_custom_call.1} parent=11 // pred_region
          %s286 = ssub.s32 2048, 2048
          %287 = vsyncadd [#allocation9], %s286
          %s288 = sshll.u32 [#allocation10], 4
          %s289 = int_to_ptr.vmem [resolvable:$true] %s288
          %294 = dma.hbm_to_vmem [thread:$0]  %s6, 2048, %s289, [#allocation9], 128, 128, 8
        $region36: #{tpu_custom_call.1} parent=11 // pred_fallthru
          _
        // Predicated region
        $region37: #{tpu_custom_call.1} parent=11 // pred_check
          %p295 = pneg %p196
        $region38: #{tpu_custom_call.1} parent=11 // pred_check_branch
          %297 = sbr.rel (%p295) target = $region40
        $region39: #{tpu_custom_call.1} parent=11 // pred_region
          %s299 = ssub.s32 2048, 2048
          %300 = vsyncadd [#allocation12], %s299
          %s301 = sshll.u32 [#allocation11], 4
          %s302 = int_to_ptr.vmem [resolvable:$true] %s301
          %307 = dma.hbm_to_vmem [thread:$0]  %s7, 2048, %s302, [#allocation12], 128, 128, 8
        $region40: #{tpu_custom_call.1} parent=11 // pred_fallthru
          _
      $region12: #{tpu_custom_call.1} parent=5 // pred_fallthru
        _
      %p308 = scmp.lt.s32.totalorder %s23, 2
      // Predicated region
      $region41: #{tpu_custom_call.1} parent=5 // pred_check
        %p309 = pneg %p308
      $region42: #{tpu_custom_call.1} parent=5 // pred_check_branch
        %311 = sbr.rel (%p309) target = $region44
      $region43: #{tpu_custom_call.1} parent=5 // pred_region
        // Predicated region
        $region45: #{tpu_custom_call.1} parent=43 // pred_check
          %p312 = pneg %p43
        $region46: #{tpu_custom_call.1} parent=43 // pred_check_branch
          %314 = sbr.rel (%p312) target = $region48
        $region47: #{tpu_custom_call.1} parent=43 // pred_region
          %s315 = sand.u32 %s33, 1
          %s316 = scalar_lea.sflag [#allocation3], %s315
          %s317 = sand.u32 %s33, 1
          %s318 = smul.addr %s317, 8
          %s319 = scalar_lea.vmem [#allocation2], %s318
          %s321 = ssub.s32 128, 128
          %322 = vsyncadd %s316, %s321
          %s323 = smul.addr %s23, 128
          %s324 = scalar_lea.hbm %s0, %s323
          %s326 = sshll.u32 %s319, 4
          %s327 = int_to_ptr.vmem [resolvable:$true] %s326
          %329 = dma.hbm_to_vmem [thread:$0]  %s324, 128, %s327, %s316
        $region48: #{tpu_custom_call.1} parent=43 // pred_fallthru
          _
      $region44: #{tpu_custom_call.1} parent=5 // pred_fallthru
        _
      %p330 = scmp.le.s32.totalorder 1, %s23
      %p331 = scmp.lt.s32.totalorder %s23, 3
      %p332 = pnand %p330, %p331
      %p333 = pneg %p332
      // Predicated region
      $region49: #{tpu_custom_call.1} parent=5 // pred_check
        _
      $region50: #{tpu_custom_call.1} parent=5 // pred_check_branch
        %335 = sbr.rel (%p332) target = $region52
      $region51: #{tpu_custom_call.1} parent=5 // pred_region
        %s336 = ssub.s32 %s23, 1
        %s337 = sand.u32 %s36, 1
        %s338 = scalar_lea.sflag [#allocation3], %s337
        %s339 = sand.u32 %s36, 1
        %s340 = smul.addr %s339, 8
        %s341 = scalar_lea.vmem [#allocation2], %s340
        // Predicated region
        $region53: #{tpu_custom_call.1} parent=51 // pred_check
          %p342 = pneg %p49
        $region54: #{tpu_custom_call.1} parent=51 // pred_check_branch
          %344 = sbr.rel (%p342) target = $region56
        $region55: #{tpu_custom_call.1} parent=51 // pred_region
          %345 = dma.done %s338, 128
        $region56: #{tpu_custom_call.1} parent=51 // pred_fallthru
          _
        // Predicated region
        $region57: #{tpu_custom_call.1} parent=51 // pred_check
          %p346 = pneg %p70
        $region58: #{tpu_custom_call.1} parent=51 // pred_check_branch
          %348 = sbr.rel (%p346) target = $region60
        $region59: #{tpu_custom_call.1} parent=51 // pred_region
          %349 = dma.done [#allocation6], 2048
        $region60: #{tpu_custom_call.1} parent=51 // pred_fallthru
          _
        // Predicated region
        $region61: #{tpu_custom_call.1} parent=51 // pred_check
          %p350 = pneg %p112
        $region62: #{tpu_custom_call.1} parent=51 // pred_check_branch
          %352 = sbr.rel (%p350) target = $region64
        $region63: #{tpu_custom_call.1} parent=51 // pred_region
          %353 = dma.done [#allocation6], 4096
        $region64: #{tpu_custom_call.1} parent=51 // pred_fallthru
          _
        // Predicated region
        $region65: #{tpu_custom_call.1} parent=51 // pred_check
          %p354 = pneg %p154
        $region66: #{tpu_custom_call.1} parent=51 // pred_check_branch
          %356 = sbr.rel (%p354) target = $region68
        $region67: #{tpu_custom_call.1} parent=51 // pred_region
          %357 = dma.done [#allocation9], 4096
        $region68: #{tpu_custom_call.1} parent=51 // pred_fallthru
          _
        // Predicated region
        $region69: #{tpu_custom_call.1} parent=51 // pred_check
          %p358 = pneg %p175
        $region70: #{tpu_custom_call.1} parent=51 // pred_check_branch
          %360 = sbr.rel (%p358) target = $region72
        $region71: #{tpu_custom_call.1} parent=51 // pred_region
          %361 = dma.done [#allocation9], 2048
        $region72: #{tpu_custom_call.1} parent=51 // pred_fallthru
          _
        // Predicated region
        $region73: #{tpu_custom_call.1} parent=51 // pred_check
          %p362 = pneg %p196
        $region74: #{tpu_custom_call.1} parent=51 // pred_check_branch
          %364 = sbr.rel (%p362) target = $region76
        $region75: #{tpu_custom_call.1} parent=51 // pred_region
          %365 = dma.done [#allocation12], 2048
        $region76: #{tpu_custom_call.1} parent=51 // pred_fallthru
          _
        %s366 = sand.u32 %s36, 1
        %s367 = scalar_lea.sflag [#allocation3], %s366
        %s368 = sand.u32 %s36, 1
        %s369 = smul.addr %s368, 8
        %s370 = scalar_lea.vmem [#allocation2], %s369
        %p371 = pneg %p49
        %p372 = pneg %p46
        %p373 = pneg %p70
        %p374 = pneg %p67
        %p375 = pneg %p91
        %p376 = pneg %p88
        %p377 = pneg %p112
        %p378 = pneg %p109
        %p379 = pneg %p133
        %p380 = pneg %p130
        %p381 = pneg %p154
        %p382 = pneg %p151
        %p383 = pneg %p175
        %p384 = pneg %p172
        %p385 = pneg %p196
        %p386 = pneg %p193
        %p387 = pneg %p222
        %p388 = pneg %p219
        %s389 = sand.u32 %s209, 1
        %s390 = scalar_lea.sflag [#allocation4], %s389
        %s391 = sand.u32 %s209, 1
        %s392 = smul.addr %s391, 16
        %s393 = scalar_lea.vmem [#allocation13], %s392
        %v394 = vld [vmem:[%s341] sm:$0xff]
        %v395 = vld [vmem:[#allocation5] sm:$0xff]
        %v396 = vld [vmem:[#allocation5 + $0x8] sm:$0xff]
        %v397 = vld [vmem:[#allocation5 + $0x10] sm:$0xff]
        %v398 = vld [vmem:[#allocation5 + $0x18] sm:$0xff]
        %v399 = vld [vmem:[#allocation5 + $0x20] sm:$0xff]
        %v400 = vld [vmem:[#allocation5 + $0x28] sm:$0xff]
        %v401 = vld [vmem:[#allocation5 + $0x30] sm:$0xff]
        %v402 = vld [vmem:[#allocation5 + $0x38] sm:$0xff]
        %v403 = vld [vmem:[#allocation5 + $0x40] sm:$0xff]
        %v404 = vld [vmem:[#allocation5 + $0x48] sm:$0xff]
        %v405 = vld [vmem:[#allocation5 + $0x50] sm:$0xff]
        %v406 = vld [vmem:[#allocation5 + $0x58] sm:$0xff]
        %v407 = vld [vmem:[#allocation5 + $0x60] sm:$0xff]
        %v408 = vld [vmem:[#allocation5 + $0x68] sm:$0xff]
        %v409 = vld [vmem:[#allocation5 + $0x70] sm:$0xff]
        %v410 = vld [vmem:[#allocation5 + $0x78] sm:$0xff]
        %v411 = vld [vmem:[%s2] sm:$0x1]
        %v413 = vlaneseq
        %v414 = vshrl.u32 %v413, 7
        %v415 = vsub.s32 0, %v414
        %v416 = vrot.slane %v411, %v415
        %418 = vmatprep.subr.mxu0 0.0
        %419 = vmatpush1.msra.mxu0 %v410
        %420 = vmatprep.subr.mxu0 0.0
        %421 = vmatpush1.msra.mxu0 %v409
        %422 = vmatprep.subr.mxu0 0.0
        %423 = vmatpush1.msra.mxu0 %v408
        %424 = vmatprep.subr.mxu0 0.0
        %425 = vmatpush1.msra.mxu0 %v407
        %426 = vmatprep.subr.mxu0 0.0
        %427 = vmatpush1.msra.mxu0 %v406
        %428 = vmatprep.subr.mxu0 0.0
        %429 = vmatpush1.msra.mxu0 %v405
        %430 = vmatprep.subr.mxu0 0.0
        %431 = vmatpush1.msra.mxu0 %v404
        %432 = vmatprep.subr.mxu0 0.0
        %433 = vmatpush1.msra.mxu0 %v403
        %434 = vmatprep.subr.mxu0 0.0
        %435 = vmatpush1.msra.mxu0 %v402
        %436 = vmatprep.subr.mxu0 0.0
        %437 = vmatpush1.msra.mxu0 %v401
        %438 = vmatprep.subr.mxu0 0.0
        %439 = vmatpush1.msra.mxu0 %v400
        %440 = vmatprep.subr.mxu0 0.0
        %441 = vmatpush1.msra.mxu0 %v399
        %442 = vmatprep.subr.mxu0 0.0
        %443 = vmatpush1.msra.mxu0 %v398
        %444 = vmatprep.subr.mxu0 0.0
        %445 = vmatpush1.msra.mxu0 %v397
        %446 = vmatprep.subr.mxu0 0.0
        %447 = vmatpush1.msra.mxu0 %v396
        %448 = vmatprep.subr.mxu0 0.0
        %449 = vmatpush1.msra.mxu0 %v395
        %450 = vmatprep.subr.mxu0 0.0
        %451 = vmatpush2.msra.mxu0 0.0
        %452 = vmatprep.subr.mxu0 0.0
        %453 = vmatpush2.msra.mxu0 0.0
        %454 = vmatprep.subr.mxu0 0.0
        %455 = vmatpush2.msra.mxu0 0.0
        %456 = vmatprep.subr.mxu0 0.0
        %457 = vmatpush2.msra.mxu0 0.0
        %458 = vmatprep.subr.mxu0 0.0
        %459 = vmatpush2.msra.mxu0 0.0
        %460 = vmatprep.subr.mxu0 0.0
        %461 = vmatpush2.msra.mxu0 0.0
        %462 = vmatprep.subr.mxu0 0.0
        %463 = vmatpush2.msra.mxu0 0.0
        %464 = vmatprep.subr.mxu0 0.0
        %465 = vmatpush2.msra.mxu0 0.0
        %466 = vmatprep.subr.mxu0 0.0
        %467 = vmatpush2.msra.mxu0 0.0
        %468 = vmatprep.subr.mxu0 0.0
        %469 = vmatpush2.msra.mxu0 0.0
        %470 = vmatprep.subr.mxu0 0.0
        %471 = vmatpush2.msra.mxu0 0.0
        %472 = vmatprep.subr.mxu0 0.0
        %473 = vmatpush2.msra.mxu0 0.0
        %474 = vmatprep.subr.mxu0 0.0
        %475 = vmatpush2.msra.mxu0 0.0
        %476 = vmatprep.subr.mxu0 0.0
        %477 = vmatpush2.msra.mxu0 0.0
        %478 = vmatprep.subr.mxu0 0.0
        %479 = vmatpush2.msra.mxu0 0.0
        %480 = vmatprep.subr.mxu0 0.0
        %481 = vmatpush2.msra.mxu0 0.0
        %482 = vmatprep.mubr.f32.mxu0 0.0
        %483 = vmatmul.mubr.f32.gmra.mxu0 %v394
        %v484 = vpop.f32.mrf.mxu0
        %v485 = vadd.f32 %v416, %v484
        %v486 = vpop.f32.mrf.mxu0
        %487 = vdwg.mxu0
        %v488 = vld [vmem:[#allocation7] sm:$0xff]
        %v489 = vld [vmem:[#allocation7 + $0x8] sm:$0xff]
        %v490 = vld [vmem:[#allocation7 + $0x10] sm:$0xff]
        %v491 = vld [vmem:[#allocation7 + $0x18] sm:$0xff]
        %v492 = vld [vmem:[#allocation7 + $0x20] sm:$0xff]
        %v493 = vld [vmem:[#allocation7 + $0x28] sm:$0xff]
        %v494 = vld [vmem:[#allocation7 + $0x30] sm:$0xff]
        %v495 = vld [vmem:[#allocation7 + $0x38] sm:$0xff]
        %v496 = vld [vmem:[#allocation7 + $0x40] sm:$0xff]
        %v497 = vld [vmem:[#allocation7 + $0x48] sm:$0xff]
        %v498 = vld [vmem:[#allocation7 + $0x50] sm:$0xff]
        %v499 = vld [vmem:[#allocation7 + $0x58] sm:$0xff]
        %v500 = vld [vmem:[#allocation7 + $0x60] sm:$0xff]
        %v501 = vld [vmem:[#allocation7 + $0x68] sm:$0xff]
        %v502 = vld [vmem:[#allocation7 + $0x70] sm:$0xff]
        %v503 = vld [vmem:[#allocation7 + $0x78] sm:$0xff]
        %v504 = vld [vmem:[%s4] sm:$0x1]
        %v506 = vlaneseq
        %v507 = vshrl.u32 %v506, 7
        %v508 = vsub.s32 0, %v507
        %v509 = vrot.slane %v504, %v508
        %511 = vmatprep.subr.mxu0 0.0
        %512 = vmatpush1.msra.mxu0 %v503
        %513 = vmatprep.subr.mxu0 0.0
        %514 = vmatpush1.msra.mxu0 %v502
        %515 = vmatprep.subr.mxu0 0.0
        %516 = vmatpush1.msra.mxu0 %v501
        %517 = vmatprep.subr.mxu0 0.0
        %518 = vmatpush1.msra.mxu0 %v500
        %519 = vmatprep.subr.mxu0 0.0
        %520 = vmatpush1.msra.mxu0 %v499
        %521 = vmatprep.subr.mxu0 0.0
        %522 = vmatpush1.msra.mxu0 %v498
        %523 = vmatprep.subr.mxu0 0.0
        %524 = vmatpush1.msra.mxu0 %v497
        %525 = vmatprep.subr.mxu0 0.0
        %526 = vmatpush1.msra.mxu0 %v496
        %527 = vmatprep.subr.mxu0 0.0
        %528 = vmatpush1.msra.mxu0 %v495
        %529 = vmatprep.subr.mxu0 0.0
        %530 = vmatpush1.msra.mxu0 %v494
        %531 = vmatprep.subr.mxu0 0.0
        %532 = vmatpush1.msra.mxu0 %v493
        %533 = vmatprep.subr.mxu0 0.0
        %534 = vmatpush1.msra.mxu0 %v492
        %535 = vmatprep.subr.mxu0 0.0
        %536 = vmatpush1.msra.mxu0 %v491
        %537 = vmatprep.subr.mxu0 0.0
        %538 = vmatpush1.msra.mxu0 %v490
        %539 = vmatprep.subr.mxu0 0.0
        %540 = vmatpush1.msra.mxu0 %v489
        %541 = vmatprep.subr.mxu0 0.0
        %542 = vmatpush1.msra.mxu0 %v488
        %543 = vmatprep.subr.mxu0 0.0
        %544 = vmatpush2.msra.mxu0 0.0
        %545 = vmatprep.subr.mxu0 0.0
        %546 = vmatpush2.msra.mxu0 0.0
        %547 = vmatprep.subr.mxu0 0.0
        %548 = vmatpush2.msra.mxu0 0.0
        %549 = vmatprep.subr.mxu0 0.0
        %550 = vmatpush2.msra.mxu0 0.0
        %551 = vmatprep.subr.mxu0 0.0
        %552 = vmatpush2.msra.mxu0 0.0
        %553 = vmatprep.subr.mxu0 0.0
        %554 = vmatpush2.msra.mxu0 0.0
        %555 = vmatprep.subr.mxu0 0.0
        %556 = vmatpush2.msra.mxu0 0.0
        %557 = vmatprep.subr.mxu0 0.0
        %558 = vmatpush2.msra.mxu0 0.0
        %559 = vmatprep.subr.mxu0 0.0
        %560 = vmatpush2.msra.mxu0 0.0
        %561 = vmatprep.subr.mxu0 0.0
        %562 = vmatpush2.msra.mxu0 0.0
        %563 = vmatprep.subr.mxu0 0.0
        %564 = vmatpush2.msra.mxu0 0.0
        %565 = vmatprep.subr.mxu0 0.0
        %566 = vmatpush2.msra.mxu0 0.0
        %567 = vmatprep.subr.mxu0 0.0
        %568 = vmatpush2.msra.mxu0 0.0
        %569 = vmatprep.subr.mxu0 0.0
        %570 = vmatpush2.msra.mxu0 0.0
        %571 = vmatprep.subr.mxu0 0.0
        %572 = vmatpush2.msra.mxu0 0.0
        %573 = vmatprep.subr.mxu0 0.0
        %574 = vmatpush2.msra.mxu0 0.0
        %575 = vmatprep.mubr.f32.mxu0 0.0
        %576 = vmatmul.mubr.f32.gmra.mxu0 %v485
        %v577 = vpop.f32.mrf.mxu0
        %v578 = vadd.f32 %v509, %v577
        %v579 = vpop.f32.mrf.mxu0
        %580 = vdwg.mxu0
        %v581 = vmax.f32 %v578, 0.0
        %s582 = scalar_lea.vmem [#allocation7], 128
        %v583 = vld [vmem:[%s582] sm:$0xff]
        %v584 = vld [vmem:[%s582 + $0x8] sm:$0xff]
        %v585 = vld [vmem:[%s582 + $0x10] sm:$0xff]
        %v586 = vld [vmem:[%s582 + $0x18] sm:$0xff]
        %v587 = vld [vmem:[%s582 + $0x20] sm:$0xff]
        %v588 = vld [vmem:[%s582 + $0x28] sm:$0xff]
        %v589 = vld [vmem:[%s582 + $0x30] sm:$0xff]
        %v590 = vld [vmem:[%s582 + $0x38] sm:$0xff]
        %v591 = vld [vmem:[%s582 + $0x40] sm:$0xff]
        %v592 = vld [vmem:[%s582 + $0x48] sm:$0xff]
        %v593 = vld [vmem:[%s582 + $0x50] sm:$0xff]
        %v594 = vld [vmem:[%s582 + $0x58] sm:$0xff]
        %v595 = vld [vmem:[%s582 + $0x60] sm:$0xff]
        %v596 = vld [vmem:[%s582 + $0x68] sm:$0xff]
        %v597 = vld [vmem:[%s582 + $0x70] sm:$0xff]
        %v598 = vld [vmem:[%s582 + $0x78] sm:$0xff]
        %s599 = scalar_lea.vmem %s4, 1
        %v600 = vld [vmem:[%s599] sm:$0x1]
        %v602 = vlaneseq
        %v603 = vshrl.u32 %v602, 7
        %v604 = vsub.s32 0, %v603
        %v605 = vrot.slane %v600, %v604
        %607 = vmatprep.subr.mxu0 0.0
        %608 = vmatpush1.msra.mxu0 %v598
        %609 = vmatprep.subr.mxu0 0.0
        %610 = vmatpush1.msra.mxu0 %v597
        %611 = vmatprep.subr.mxu0 0.0
        %612 = vmatpush1.msra.mxu0 %v596
        %613 = vmatprep.subr.mxu0 0.0
        %614 = vmatpush1.msra.mxu0 %v595
        %615 = vmatprep.subr.mxu0 0.0
        %616 = vmatpush1.msra.mxu0 %v594
        %617 = vmatprep.subr.mxu0 0.0
        %618 = vmatpush1.msra.mxu0 %v593
        %619 = vmatprep.subr.mxu0 0.0
        %620 = vmatpush1.msra.mxu0 %v592
        %621 = vmatprep.subr.mxu0 0.0
        %622 = vmatpush1.msra.mxu0 %v591
        %623 = vmatprep.subr.mxu0 0.0
        %624 = vmatpush1.msra.mxu0 %v590
        %625 = vmatprep.subr.mxu0 0.0
        %626 = vmatpush1.msra.mxu0 %v589
        %627 = vmatprep.subr.mxu0 0.0
        %628 = vmatpush1.msra.mxu0 %v588
        %629 = vmatprep.subr.mxu0 0.0
        %630 = vmatpush1.msra.mxu0 %v587
        %631 = vmatprep.subr.mxu0 0.0
        %632 = vmatpush1.msra.mxu0 %v586
        %633 = vmatprep.subr.mxu0 0.0
        %634 = vmatpush1.msra.mxu0 %v585
        %635 = vmatprep.subr.mxu0 0.0
        %636 = vmatpush1.msra.mxu0 %v584
        %637 = vmatprep.subr.mxu0 0.0
        %638 = vmatpush1.msra.mxu0 %v583
        %639 = vmatprep.subr.mxu0 0.0
        %640 = vmatpush2.msra.mxu0 0.0
        %641 = vmatprep.subr.mxu0 0.0
        %642 = vmatpush2.msra.mxu0 0.0
        %643 = vmatprep.subr.mxu0 0.0
        %644 = vmatpush2.msra.mxu0 0.0
        %645 = vmatprep.subr.mxu0 0.0
        %646 = vmatpush2.msra.mxu0 0.0
        %647 = vmatprep.subr.mxu0 0.0
        %648 = vmatpush2.msra.mxu0 0.0
        %649 = vmatprep.subr.mxu0 0.0
        %650 = vmatpush2.msra.mxu0 0.0
        %651 = vmatprep.subr.mxu0 0.0
        %652 = vmatpush2.msra.mxu0 0.0
        %653 = vmatprep.subr.mxu0 0.0
        %654 = vmatpush2.msra.mxu0 0.0
        %655 = vmatprep.subr.mxu0 0.0
        %656 = vmatpush2.msra.mxu0 0.0
        %657 = vmatprep.subr.mxu0 0.0
        %658 = vmatpush2.msra.mxu0 0.0
        %659 = vmatprep.subr.mxu0 0.0
        %660 = vmatpush2.msra.mxu0 0.0
        %661 = vmatprep.subr.mxu0 0.0
        %662 = vmatpush2.msra.mxu0 0.0
        %663 = vmatprep.subr.mxu0 0.0
        %664 = vmatpush2.msra.mxu0 0.0
        %665 = vmatprep.subr.mxu0 0.0
        %666 = vmatpush2.msra.mxu0 0.0
        %667 = vmatprep.subr.mxu0 0.0
        %668 = vmatpush2.msra.mxu0 0.0
        %669 = vmatprep.subr.mxu0 0.0
        %670 = vmatpush2.msra.mxu0 0.0
        %671 = vmatprep.mubr.f32.mxu0 0.0
        %672 = vmatmul.mubr.f32.gmra.mxu0 %v581
        %v673 = vpop.f32.mrf.mxu0
        %v674 = vadd.f32 %v605, %v673
        %v675 = vpop.f32.mrf.mxu0
        %676 = vdwg.mxu0
        %v677 = vmax.f32 %v674, 0.0
        %v678 = vld [vmem:[#allocation8] sm:$0xff]
        %v679 = vld [vmem:[#allocation8 + $0x8] sm:$0xff]
        %v680 = vld [vmem:[#allocation8 + $0x10] sm:$0xff]
        %v681 = vld [vmem:[#allocation8 + $0x18] sm:$0xff]
        %v682 = vld [vmem:[#allocation8 + $0x20] sm:$0xff]
        %v683 = vld [vmem:[#allocation8 + $0x28] sm:$0xff]
        %v684 = vld [vmem:[#allocation8 + $0x30] sm:$0xff]
        %v685 = vld [vmem:[#allocation8 + $0x38] sm:$0xff]
        %v686 = vld [vmem:[#allocation8 + $0x40] sm:$0xff]
        %v687 = vld [vmem:[#allocation8 + $0x48] sm:$0xff]
        %v688 = vld [vmem:[#allocation8 + $0x50] sm:$0xff]
        %v689 = vld [vmem:[#allocation8 + $0x58] sm:$0xff]
        %v690 = vld [vmem:[#allocation8 + $0x60] sm:$0xff]
        %v691 = vld [vmem:[#allocation8 + $0x68] sm:$0xff]
        %v692 = vld [vmem:[#allocation8 + $0x70] sm:$0xff]
        %v693 = vld [vmem:[#allocation8 + $0x78] sm:$0xff]
        %v694 = vld [vmem:[#allocation8 + $0x80] sm:$0xff]
        %v695 = vld [vmem:[#allocation8 + $0x88] sm:$0xff]
        %v696 = vld [vmem:[#allocation8 + $0x90] sm:$0xff]
        %v697 = vld [vmem:[#allocation8 + $0x98] sm:$0xff]
        %v698 = vld [vmem:[#allocation8 + $0xa0] sm:$0xff]
        %v699 = vld [vmem:[#allocation8 + $0xa8] sm:$0xff]
        %v700 = vld [vmem:[#allocation8 + $0xb0] sm:$0xff]
        %v701 = vld [vmem:[#allocation8 + $0xb8] sm:$0xff]
        %v702 = vld [vmem:[#allocation8 + $0xc0] sm:$0xff]
        %v703 = vld [vmem:[#allocation8 + $0xc8] sm:$0xff]
        %v704 = vld [vmem:[#allocation8 + $0xd0] sm:$0xff]
        %v705 = vld [vmem:[#allocation8 + $0xd8] sm:$0xff]
        %v706 = vld [vmem:[#allocation8 + $0xe0] sm:$0xff]
        %v707 = vld [vmem:[#allocation8 + $0xe8] sm:$0xff]
        %v708 = vld [vmem:[#allocation8 + $0xf0] sm:$0xff]
        %v709 = vld [vmem:[#allocation8 + $0xf8] sm:$0xff]
        %710 = vmatprep.subr.mxu0 %v709
        %711 = vmatpush1.msra.mxu0 %v708
        %712 = vmatprep.subr.mxu0 %v707
        %713 = vmatpush1.msra.mxu0 %v706
        %714 = vmatprep.subr.mxu0 %v705
        %715 = vmatpush1.msra.mxu0 %v704
        %716 = vmatprep.subr.mxu0 %v703
        %717 = vmatpush1.msra.mxu0 %v702
        %718 = vmatprep.subr.mxu0 %v701
        %719 = vmatpush1.msra.mxu0 %v700
        %720 = vmatprep.subr.mxu0 %v699
        %721 = vmatpush1.msra.mxu0 %v698
        %722 = vmatprep.subr.mxu0 %v697
        %723 = vmatpush1.msra.mxu0 %v696
        %724 = vmatprep.subr.mxu0 %v695
        %725 = vmatpush1.msra.mxu0 %v694
        %726 = vmatprep.subr.mxu0 %v693
        %727 = vmatpush1.msra.mxu0 %v692
        %728 = vmatprep.subr.mxu0 %v691
        %729 = vmatpush1.msra.mxu0 %v690
        %730 = vmatprep.subr.mxu0 %v689
        %731 = vmatpush1.msra.mxu0 %v688
        %732 = vmatprep.subr.mxu0 %v687
        %733 = vmatpush1.msra.mxu0 %v686
        %734 = vmatprep.subr.mxu0 %v685
        %735 = vmatpush1.msra.mxu0 %v684
        %736 = vmatprep.subr.mxu0 %v683
        %737 = vmatpush1.msra.mxu0 %v682
        %738 = vmatprep.subr.mxu0 %v681
        %739 = vmatpush1.msra.mxu0 %v680
        %740 = vmatprep.subr.mxu0 %v679
        %741 = vmatpush1.msra.mxu0 %v678
        %742 = vmatprep.subr.mxu0 0.0
        %743 = vmatpush2.msra.mxu0 0.0
        %744 = vmatprep.subr.mxu0 0.0
        %745 = vmatpush2.msra.mxu0 0.0
        %746 = vmatprep.subr.mxu0 0.0
        %747 = vmatpush2.msra.mxu0 0.0
        %748 = vmatprep.subr.mxu0 0.0
        %749 = vmatpush2.msra.mxu0 0.0
        %750 = vmatprep.subr.mxu0 0.0
        %751 = vmatpush2.msra.mxu0 0.0
        %752 = vmatprep.subr.mxu0 0.0
        %753 = vmatpush2.msra.mxu0 0.0
        %754 = vmatprep.subr.mxu0 0.0
        %755 = vmatpush2.msra.mxu0 0.0
        %756 = vmatprep.subr.mxu0 0.0
        %757 = vmatpush2.msra.mxu0 0.0
        %758 = vmatprep.subr.mxu0 0.0
        %759 = vmatpush2.msra.mxu0 0.0
        %760 = vmatprep.subr.mxu0 0.0
        %761 = vmatpush2.msra.mxu0 0.0
        %762 = vmatprep.subr.mxu0 0.0
        %763 = vmatpush2.msra.mxu0 0.0
        %764 = vmatprep.subr.mxu0 0.0
        %765 = vmatpush2.msra.mxu0 0.0
        %766 = vmatprep.subr.mxu0 0.0
        %767 = vmatpush2.msra.mxu0 0.0
        %768 = vmatprep.subr.mxu0 0.0
        %769 = vmatpush2.msra.mxu0 0.0
        %770 = vmatprep.subr.mxu0 0.0
        %771 = vmatpush2.msra.mxu0 0.0
        %772 = vmatprep.subr.mxu0 0.0
        %773 = vmatpush2.msra.mxu0 0.0
        %774 = vmatprep.mubr.f32.mxu0 0.0
        %775 = vmatmul.mubr.f32.gmra.mxu0 %v677
        %v776 = vpop.f32.mrf.mxu0
        %v777 = vadd.f32 0.0, %v776
        %v778 = vpop.f32.mrf.mxu0
        %v779 = vadd.f32 0.0, %v778
        %780 = vdwg.mxu0
        %v781 = vld [vmem:[#allocation10] sm:$0xff]
        %v782 = vld [vmem:[#allocation10 + $0x8] sm:$0xff]
        %v783 = vld [vmem:[#allocation10 + $0x10] sm:$0xff]
        %v784 = vld [vmem:[#allocation10 + $0x18] sm:$0xff]
        %v785 = vld [vmem:[#allocation10 + $0x20] sm:$0xff]
        %v786 = vld [vmem:[#allocation10 + $0x28] sm:$0xff]
        %v787 = vld [vmem:[#allocation10 + $0x30] sm:$0xff]
        %v788 = vld [vmem:[#allocation10 + $0x38] sm:$0xff]
        %v789 = vld [vmem:[#allocation10 + $0x40] sm:$0xff]
        %v790 = vld [vmem:[#allocation10 + $0x48] sm:$0xff]
        %v791 = vld [vmem:[#allocation10 + $0x50] sm:$0xff]
        %v792 = vld [vmem:[#allocation10 + $0x58] sm:$0xff]
        %v793 = vld [vmem:[#allocation10 + $0x60] sm:$0xff]
        %v794 = vld [vmem:[#allocation10 + $0x68] sm:$0xff]
        %v795 = vld [vmem:[#allocation10 + $0x70] sm:$0xff]
        %v796 = vld [vmem:[#allocation10 + $0x78] sm:$0xff]
        %797 = vmatprep.subr.mxu0 0.0
        %798 = vmatpush1.msra.mxu0 %v796
        %799 = vmatprep.subr.mxu0 0.0
        %800 = vmatpush1.msra.mxu0 %v795
        %801 = vmatprep.subr.mxu0 0.0
        %802 = vmatpush1.msra.mxu0 %v794
        %803 = vmatprep.subr.mxu0 0.0
        %804 = vmatpush1.msra.mxu0 %v793
        %805 = vmatprep.subr.mxu0 0.0
        %806 = vmatpush1.msra.mxu0 %v792
        %807 = vmatprep.subr.mxu0 0.0
        %808 = vmatpush1.msra.mxu0 %v791
        %809 = vmatprep.subr.mxu0 0.0
        %810 = vmatpush1.msra.mxu0 %v790
        %811 = vmatprep.subr.mxu0 0.0
        %812 = vmatpush1.msra.mxu0 %v789
        %813 = vmatprep.subr.mxu0 0.0
        %814 = vmatpush1.msra.mxu0 %v788
        %815 = vmatprep.subr.mxu0 0.0
        %816 = vmatpush1.msra.mxu0 %v787
        %817 = vmatprep.subr.mxu0 0.0
        %818 = vmatpush1.msra.mxu0 %v786
        %819 = vmatprep.subr.mxu0 0.0
        %820 = vmatpush1.msra.mxu0 %v785
        %821 = vmatprep.subr.mxu0 0.0
        %822 = vmatpush1.msra.mxu0 %v784
        %823 = vmatprep.subr.mxu0 0.0
        %824 = vmatpush1.msra.mxu0 %v783
        %825 = vmatprep.subr.mxu0 0.0
        %826 = vmatpush1.msra.mxu0 %v782
        %827 = vmatprep.subr.mxu0 0.0
        %828 = vmatpush1.msra.mxu0 %v781
        %829 = vmatprep.subr.mxu0 0.0
        %830 = vmatpush2.msra.mxu0 0.0
        %831 = vmatprep.subr.mxu0 0.0
        %832 = vmatpush2.msra.mxu0 0.0
        %833 = vmatprep.subr.mxu0 0.0
        %834 = vmatpush2.msra.mxu0 0.0
        %835 = vmatprep.subr.mxu0 0.0
        %836 = vmatpush2.msra.mxu0 0.0
        %837 = vmatprep.subr.mxu0 0.0
        %838 = vmatpush2.msra.mxu0 0.0
        %839 = vmatprep.subr.mxu0 0.0
        %840 = vmatpush2.msra.mxu0 0.0
        %841 = vmatprep.subr.mxu0 0.0
        %842 = vmatpush2.msra.mxu0 0.0
        %843 = vmatprep.subr.mxu0 0.0
        %844 = vmatpush2.msra.mxu0 0.0
        %845 = vmatprep.subr.mxu0 0.0
        %846 = vmatpush2.msra.mxu0 0.0
        %847 = vmatprep.subr.mxu0 0.0
        %848 = vmatpush2.msra.mxu0 0.0
        %849 = vmatprep.subr.mxu0 0.0
        %850 = vmatpush2.msra.mxu0 0.0
        %851 = vmatprep.subr.mxu0 0.0
        %852 = vmatpush2.msra.mxu0 0.0
        %853 = vmatprep.subr.mxu0 0.0
        %854 = vmatpush2.msra.mxu0 0.0
        %855 = vmatprep.subr.mxu0 0.0
        %856 = vmatpush2.msra.mxu0 0.0
        %857 = vmatprep.subr.mxu0 0.0
        %858 = vmatpush2.msra.mxu0 0.0
        %859 = vmatprep.subr.mxu0 0.0
        %860 = vmatpush2.msra.mxu0 0.0
        %861 = vmatprep.mubr.f32.mxu0 0.0
        %862 = vmatmul.mubr.f32.gmra.mxu0 %v777
        %v863 = vpop.f32.mrf.mxu0
        %v864 = vadd.f32 0.0, %v863
        %v865 = vpop.f32.mrf.mxu0
        %866 = vdwg.mxu0
        %v867 = vld [vmem:[#allocation11] sm:$0xff]
        %v868 = vld [vmem:[#allocation11 + $0x8] sm:$0xff]
        %v869 = vld [vmem:[#allocation11 + $0x10] sm:$0xff]
        %v870 = vld [vmem:[#allocation11 + $0x18] sm:$0xff]
        %v871 = vld [vmem:[#allocation11 + $0x20] sm:$0xff]
        %v872 = vld [vmem:[#allocation11 + $0x28] sm:$0xff]
        %v873 = vld [vmem:[#allocation11 + $0x30] sm:$0xff]
        %v874 = vld [vmem:[#allocation11 + $0x38] sm:$0xff]
        %v875 = vld [vmem:[#allocation11 + $0x40] sm:$0xff]
        %v876 = vld [vmem:[#allocation11 + $0x48] sm:$0xff]
        %v877 = vld [vmem:[#allocation11 + $0x50] sm:$0xff]
        %v878 = vld [vmem:[#allocation11 + $0x58] sm:$0xff]
        %v879 = vld [vmem:[#allocation11 + $0x60] sm:$0xff]
        %v880 = vld [vmem:[#allocation11 + $0x68] sm:$0xff]
        %v881 = vld [vmem:[#allocation11 + $0x70] sm:$0xff]
        %v882 = vld [vmem:[#allocation11 + $0x78] sm:$0xff]
        %883 = vmatprep.subr.mxu0 0.0
        %884 = vmatpush1.msra.mxu0 %v882
        %885 = vmatprep.subr.mxu0 0.0
        %886 = vmatpush1.msra.mxu0 %v881
        %887 = vmatprep.subr.mxu0 0.0
        %888 = vmatpush1.msra.mxu0 %v880
        %889 = vmatprep.subr.mxu0 0.0
        %890 = vmatpush1.msra.mxu0 %v879
        %891 = vmatprep.subr.mxu0 0.0
        %892 = vmatpush1.msra.mxu0 %v878
        %893 = vmatprep.subr.mxu0 0.0
        %894 = vmatpush1.msra.mxu0 %v877
        %895 = vmatprep.subr.mxu0 0.0
        %896 = vmatpush1.msra.mxu0 %v876
        %897 = vmatprep.subr.mxu0 0.0
        %898 = vmatpush1.msra.mxu0 %v875
        %899 = vmatprep.subr.mxu0 0.0
        %900 = vmatpush1.msra.mxu0 %v874
        %901 = vmatprep.subr.mxu0 0.0
        %902 = vmatpush1.msra.mxu0 %v873
        %903 = vmatprep.subr.mxu0 0.0
        %904 = vmatpush1.msra.mxu0 %v872
        %905 = vmatprep.subr.mxu0 0.0
        %906 = vmatpush1.msra.mxu0 %v871
        %907 = vmatprep.subr.mxu0 0.0
        %908 = vmatpush1.msra.mxu0 %v870
        %909 = vmatprep.subr.mxu0 0.0
        %910 = vmatpush1.msra.mxu0 %v869
        %911 = vmatprep.subr.mxu0 0.0
        %912 = vmatpush1.msra.mxu0 %v868
        %913 = vmatprep.subr.mxu0 0.0
        %914 = vmatpush1.msra.mxu0 %v867
        %915 = vmatprep.subr.mxu0 0.0
        %916 = vmatpush2.msra.mxu0 0.0
        %917 = vmatprep.subr.mxu0 0.0
        %918 = vmatpush2.msra.mxu0 0.0
        %919 = vmatprep.subr.mxu0 0.0
        %920 = vmatpush2.msra.mxu0 0.0
        %921 = vmatprep.subr.mxu0 0.0
        %922 = vmatpush2.msra.mxu0 0.0
        %923 = vmatprep.subr.mxu0 0.0
        %924 = vmatpush2.msra.mxu0 0.0
        %925 = vmatprep.subr.mxu0 0.0
        %926 = vmatpush2.msra.mxu0 0.0
        %927 = vmatprep.subr.mxu0 0.0
        %928 = vmatpush2.msra.mxu0 0.0
        %929 = vmatprep.subr.mxu0 0.0
        %930 = vmatpush2.msra.mxu0 0.0
        %931 = vmatprep.subr.mxu0 0.0
        %932 = vmatpush2.msra.mxu0 0.0
        %933 = vmatprep.subr.mxu0 0.0
        %934 = vmatpush2.msra.mxu0 0.0
        %935 = vmatprep.subr.mxu0 0.0
        %936 = vmatpush2.msra.mxu0 0.0
        %937 = vmatprep.subr.mxu0 0.0
        %938 = vmatpush2.msra.mxu0 0.0
        %939 = vmatprep.subr.mxu0 0.0
        %940 = vmatpush2.msra.mxu0 0.0
        %941 = vmatprep.subr.mxu0 0.0
        %942 = vmatpush2.msra.mxu0 0.0
        %943 = vmatprep.subr.mxu0 0.0
        %944 = vmatpush2.msra.mxu0 0.0
        %945 = vmatprep.subr.mxu0 0.0
        %946 = vmatpush2.msra.mxu0 0.0
        %947 = vmatprep.mubr.f32.mxu0 0.0
        %948 = vmatmul.mubr.f32.gmra.mxu0 %v779
        %v949 = vpop.f32.mrf.mxu0
        %v950 = vadd.f32 0.0, %v949
        %v951 = vpop.f32.mrf.mxu0
        %952 = vdwg.mxu0
        %v953 = vsub.f32 %v864, %v677
        %954 = vst [vmem:[%s393] sm:$0xff] %v953
        %955 = vst [vmem:[%s393 + $0x8] sm:$0xff] %v950
        %s956 = sand.u32 %s209, 1
        %s957 = scalar_lea.sflag [#allocation4], %s956
        %s958 = sand.u32 %s209, 1
        %s959 = smul.addr %s958, 16
        %s960 = scalar_lea.vmem [#allocation13], %s959
        // Predicated region
        $region77: #{tpu_custom_call.1} parent=51 // pred_check
          %p961 = pneg %p219
        $region78: #{tpu_custom_call.1} parent=51 // pred_check_branch
          %963 = sbr.rel (%p961) target = $region80
        $region79: #{tpu_custom_call.1} parent=51 // pred_region
          %s965 = ssub.s32 256, 256
          %966 = vsyncadd %s957, %s965
          %s967 = smul.addr %s28, 2
          %s968 = smul.addr %s967, 128
          %s969 = scalar_lea.hbm %s8, %s968
          %s971 = sshll.u32 %s960, 4
          %s972 = int_to_ptr.vmem [resolvable:$true] %s971
          %974 = dma.vmem_to_hbm [thread:$0]  %s972, 256, %s969, %s957
        $region80: #{tpu_custom_call.1} parent=51 // pred_fallthru
          _
      $region52: #{tpu_custom_call.1} parent=5 // pred_fallthru
        _
      %p975 = scmp.le.s32.totalorder 2, %s23
      // Predicated region
      $region81: #{tpu_custom_call.1} parent=5 // pred_check
        %p976 = pneg %p975
      $region82: #{tpu_custom_call.1} parent=5 // pred_check_branch
        %978 = sbr.rel (%p976) target = $region84
      $region83: #{tpu_custom_call.1} parent=5 // pred_region
        %s979 = ssub.s32 %s23, 2
        // Predicated region
        $region85: #{tpu_custom_call.1} parent=83 // pred_check
          %p980 = pneg %p225
        $region86: #{tpu_custom_call.1} parent=83 // pred_check_branch
          %982 = sbr.rel (%p980) target = $region88
        $region87: #{tpu_custom_call.1} parent=83 // pred_region
          %s983 = sand.u32 %s210, 1
          %s984 = scalar_lea.sflag [#allocation4], %s983
          %s985 = sand.u32 %s210, 1
          %s986 = smul.addr %s985, 16
          %s987 = scalar_lea.vmem [#allocation13], %s986
          %988 = dma.done %s984, 256
        $region88: #{tpu_custom_call.1} parent=83 // pred_fallthru
          _
      $region84: #{tpu_custom_call.1} parent=5 // pred_fallthru
        _
    $region6: #{tpu_custom_call.1} parent=1 // loop_footer
      %s27 = sadd.s32 1, %s23
    $region7: #{tpu_custom_call.1} parent=1 // loop_footer_branch
      %22 = sbr.rel target = $region3
    $region8: #{tpu_custom_call.1} parent=1 // loop_exit
      _
    %989 = vsyncpa [#allocation3], 1
    %s990 = scalar_lea.sflag [#allocation3], 1
    %991 = vsyncpa %s990, 1
    %992 = vsyncpa [#allocation6], 1
    %993 = vsyncpa [#allocation9], 1
    %994 = vsyncpa [#allocation12], 1
    %995 = vsyncpa [#allocation4], 1
    %s996 = scalar_lea.sflag [#allocation4], 1
    %997 = vsyncpa %s996, 1

</llo_original>
